<compile_context>
chip_gen: v7x
topology: tpu7x:2x2x1
jax: 0.10.0
libtpu: 0.0.40
codegen_flags: <defaults>
</compile_context>

<pallas_src>
import numpy as np
import jax
import jax.numpy as jnp
from jax.experimental import pallas as pl
from jax.experimental.pallas import tpu as pltpu


# ----------------------------- Pallas kernels -------------------------------


def _pool_conv0_kernel(x_ref, p_ref, w0_ref, s0_ref, b0_ref, a0_ref):
    # x_ref  : (1, H*W, C_in)   bf16  one batch element, NHWC flattened (lane dim = C_in)
    # p_ref  : (25, H*W)        bf16  0/1 sum-pooling matrix (avg_pool 5x5 stride 3)
    # w0_ref : (C_in, 128)      bf16  1x1 conv weight
    # s0_ref : (1, 128) f32     folded BN0 scale = gamma / sqrt(var + eps)
    # b0_ref : (1, 128) f32     folded BN0 bias  = beta - mean * scale
    # a0_ref : (1, 25, 128)     bf16  avg_pool -> conv0 -> BN -> ReLU activations
    x = x_ref[0]                                                     # (H*W, C_in)
    # avg_pool as one MXU matmul: sum-pool then scale by 1/25 in f32.
    pooled = jnp.dot(p_ref[...], x,
                     preferred_element_type=jnp.float32) * (1.0 / 25.0)   # (25, C_in)
    # 1x1 conv (one matmul) + fused inference-BN + ReLU epilogue in f32.
    a0 = jnp.dot(pooled.astype(jnp.bfloat16), w0_ref[...],
                 preferred_element_type=jnp.float32)                      # (25, 128)
    a0 = jnp.maximum(a0 * s0_ref[...] + b0_ref[...], 0.0)
    a0_ref[0] = a0.astype(jnp.bfloat16)


def _conv1_fc_kernel(a_ref, w1_ref, s1_ref, b1_ref, fw_ref, fb_ref, o_ref):
    # a_ref : (N, 25*128)   bf16  conv1 input; (25,128)->3200 row-major flatten == im2col
    # w1_ref: (25*128, 768) bf16  conv1 weight reshaped from (KH,KW,I,O)
    # s1_ref/b1_ref: (1, 768) f32 folded BN1 scale/bias
    # fw_ref: (768, NCpad)  bf16  fc weight (columns zero-padded to a 128 multiple)
    # fb_ref: (1, NCpad)    f32   fc bias (zero-padded)
    # o_ref : (N, NCpad)    f32   padded logits
    y1 = jnp.dot(a_ref[...], w1_ref[...],
                 preferred_element_type=jnp.float32)                      # (N, 768)
    y1 = jnp.maximum(y1 * s1_ref[...] + b1_ref[...], 0.0)
    o_ref[...] = jnp.dot(y1.astype(jnp.bfloat16), fw_ref[...],
                         preferred_element_type=jnp.float32) + fb_ref[...]


# ------------------------------ glue / wrapper -------------------------------


def _fold_bn(gamma, beta, mean, var, eps):
    scale = (gamma / jnp.sqrt(var + eps)).astype(jnp.float32)
    bias = (beta - mean * scale).astype(jnp.float32)
    return scale, bias


def _pool_matrix(H, W, k, s):
    """0/1 matrix P of shape (PH*PW, H*W) s.t. P @ x_flat = sum-pool(x), windows k, stride s."""
    PH, PW = (H - k) // s + 1, (W - k) // s + 1
    P = np.zeros((PH * PW, H * W), np.float32)
    for i in range(PH):
        for j in range(PW):
            for di in range(k):
                for dj in range(k):
                    P[i * PW + j, (i * s + di) * W + (j * s + dj)] = 1.0
    return P, PH, PW


def inception_aux_forward(x_nchw, p, *, eps=1e-3):
    """InceptionAux forward (inference-mode BN), NCHW input -> (N, num_classes) logits."""
    N, C_in, H, W = x_nchw.shape
    C0 = p["w0"].shape[0]            # 128 (BasicConv2d factor=1 => channel counts unchanged)
    C1 = p["w1"].shape[0]            # 768
    KH, KW = p["w1"].shape[2], p["w1"].shape[3]   # 5, 5
    num_classes = p["fc_w"].shape[0]

    P_np, PH, PW = _pool_matrix(H, W, 5, 3)
    assert PH == KH and PW == KW and (PH - KH + 1) * (PW - KW + 1) == 1, (
        "InceptionAux requires the pooled map to be exactly 5x5 (input spatial 17..19); "
        f"got pooled {PH}x{PW}")
    HW = H * W
    Ppos = PH * PW                   # 25

    # --- layout plumbing + BN folding + bf16 casts (tiny, one-time XLA ops) ---
    x_flat = jnp.transpose(x_nchw, (0, 2, 3, 1)).reshape(N, HW, C_in).astype(jnp.bfloat16)
    Pmat = jnp.asarray(P_np, dtype=jnp.bfloat16)

    w0 = jnp.transpose(p["w0"].reshape(C0, C_in), (1, 0)).astype(jnp.bfloat16)   # (C_in, C0)
    s0, b0 = _fold_bn(p["bn0_g"], p["bn0_b"], p["bn0_m"], p["bn0_v"], eps)
    s0, b0 = s0.reshape(1, C0), b0.reshape(1, C0)

    # conv1 weight (O,I,KH,KW) -> (KH,KW,I,O) -> (KH*KW*I, O); row index kh*5*C0+kw*C0+c
    # matches the row-major flatten of the (25, C0) conv0 activations, so im2col is free.
    w1 = jnp.transpose(p["w1"], (2, 3, 1, 0)).reshape(KH * KW * C0, C1).astype(jnp.bfloat16)
    s1, b1 = _fold_bn(p["bn1_g"], p["bn1_b"], p["bn1_m"], p["bn1_v"], eps)
    s1, b1 = s1.reshape(1, C1), b1.reshape(1, C1)

    ncpad = ((num_classes + 127) // 128) * 128   # lane-dense fc output
    fw = jnp.zeros((C1, ncpad), jnp.float32).at[:, :num_classes].set(p["fc_w"].T)
    fw = fw.astype(jnp.bfloat16)
    fb = jnp.zeros((1, ncpad), jnp.float32).at[0, :num_classes].set(p["fc_b"])

    # --- kernel 1: avg_pool(5,3) + conv0(1x1) + BN + ReLU, grid over batch (parallel) ---
    a0 = pl.pallas_call(
        _pool_conv0_kernel,
        out_shape=jax.ShapeDtypeStruct((N, Ppos, C0), jnp.bfloat16),
        grid=(N,),
        in_specs=[
            pl.BlockSpec((1, HW, C_in), lambda n: (n, 0, 0)),
            pl.BlockSpec((Ppos, HW), lambda n: (0, 0)),
            pl.BlockSpec((C_in, C0), lambda n: (0, 0)),
            pl.BlockSpec((1, C0), lambda n: (0, 0)),
            pl.BlockSpec((1, C0), lambda n: (0, 0)),
        ],
        out_specs=pl.BlockSpec((1, Ppos, C0), lambda n: (n, 0, 0)),
        compiler_params=pltpu.CompilerParams(dimension_semantics=("parallel",)),
    )(x_flat, Pmat, w0, s0, b0)

    # Free (bitcast) reshape in XLA: (N, 25, 128) -> (N, 3200); no in-kernel relayout.
    a0_flat = a0.reshape(N, Ppos * C0)

    # --- kernel 2: conv1(5x5 VALID == one matmul) + BN + ReLU + fc, whole batch at once ---
    # TODO(synk): for v7x, conv1's 768 output channels could be split over a second
    # "parallel" grid axis (partial logits summed in the wrapper) to use both TensorCores.
    logits_pad = pl.pallas_call(
        _conv1_fc_kernel,
        out_shape=jax.ShapeDtypeStruct((N, ncpad), jnp.float32),
        grid=(1,),
        in_specs=[
            pl.BlockSpec((N, Ppos * C0), lambda i: (0, 0)),
            pl.BlockSpec((Ppos * C0, C1), lambda i: (0, 0)),
            pl.BlockSpec((1, C1), lambda i: (0, 0)),
            pl.BlockSpec((1, C1), lambda i: (0, 0)),
            pl.BlockSpec((C1, ncpad), lambda i: (0, 0)),
            pl.BlockSpec((1, ncpad), lambda i: (0, 0)),
        ],
        out_specs=pl.BlockSpec((N, ncpad), lambda i: (0, 0)),
        compiler_params=pltpu.CompilerParams(dimension_semantics=("arbitrary",)),
    )(a0_flat, w1, s1, b1, fw, fb)

    return logits_pad[:, :num_classes]


# ------------------------------- reference ----------------------------------


def _reference(x, p, *, eps=1e-3):
    """Pure-JAX InceptionAux forward.  Matmul/conv operands are rounded to bf16
    (mirroring the kernels' MXU operand precision); accumulation and BN/ReLU/bias
    epilogues are f32, exactly as in the kernels."""
    f32, bf16 = jnp.float32, jnp.bfloat16
    q = lambda a: a.astype(bf16).astype(f32)
    hi = jax.lax.Precision.HIGHEST

    def bn(y, g, b, m, v):
        s = g / jnp.sqrt(v + eps)
        return y * s[None, :, None, None] + (b - m * s)[None, :, None, None]

    xq = q(x.astype(f32))
    pooled = jax.lax.reduce_window(xq, 0.0, jax.lax.add,
                                   (1, 1, 5, 5), (1, 1, 3, 3), "VALID") * (1.0 / 25.0)

    y0 = jax.lax.conv_general_dilated(
        q(pooled), q(p["w0"].astype(f32)), (1, 1), "VALID",
        dimension_numbers=("NCHW", "OIHW", "NCHW"), precision=hi)
    y0 = jnp.maximum(bn(y0, p["bn0_g"], p["bn0_b"], p["bn0_m"], p["bn0_v"]), 0.0)

    y1 = jax.lax.conv_general_dilated(
        q(y0), q(p["w1"].astype(f32)), (1, 1), "VALID",
        dimension_numbers=("NCHW", "OIHW", "NCHW"), precision=hi)
    y1 = jnp.maximum(bn(y1, p["bn1_g"], p["bn1_b"], p["bn1_m"], p["bn1_v"]), 0.0)

    flat = y1.reshape(y1.shape[0], -1)                                   # (N, 768)
    return jnp.dot(q(flat), q(p["fc_w"].astype(f32)).T, precision=hi) + p["fc_b"][None, :]


# --------------------------------- demo --------------------------------------


if __name__ == "__main__":
    key = jax.random.PRNGKey(0)
    ks = jax.random.split(key, 13)
    norm = jax.random.normal

    # InceptionAux(in_channels=128, num_classes=10) on a 17x17 feature map.
    # conv0->128 / conv1->768 / fc(768,...) are fixed by the module; the 17x17 input is
    # what the 5x5/s3 pool + 5x5 VALID conv + flatten-to-768 imply.
    N, C_in, H, W = 2, 128, 17, 17
    C0, C1, K1 = 128, 768, 5
    num_classes = 10

    p = {
        "w0": norm(ks[0], (C0, C_in, 1, 1), jnp.float32) * 0.08,
        "bn0_g": 1.0 + 0.1 * norm(ks[1], (C0,), jnp.float32),
        "bn0_b": 0.1 * norm(ks[2], (C0,), jnp.float32),
        "bn0_m": 0.1 * norm(ks[3], (C0,), jnp.float32),
        "bn0_v": jnp.abs(norm(ks[4], (C0,), jnp.float32)) + 0.5,
        "w1": norm(ks[5], (C1, C0, K1, K1), jnp.float32) * 0.02,
        "bn1_g": 1.0 + 0.1 * norm(ks[6], (C1,), jnp.float32),
        "bn1_b": 0.1 * norm(ks[7], (C1,), jnp.float32),
        "bn1_m": 0.1 * norm(ks[8], (C1,), jnp.float32),
        "bn1_v": jnp.abs(norm(ks[9], (C1,), jnp.float32)) + 0.5,
        "fc_w": norm(ks[10], (num_classes, C1), jnp.float32) * 0.03,
        "fc_b": 0.1 * norm(ks[11], (num_classes,), jnp.float32),
    }
    x = norm(ks[12], (N, C_in, H, W), jnp.float32)

    out = inception_aux_forward(x, p)
    out = jax.block_until_ready(out)

    ref = _reference(x, p)
    assert out.shape == (N, num_classes), out.shape
    max_err = jnp.max(jnp.abs(out - ref))
    assert jnp.allclose(out, ref, atol=3e-3, rtol=3e-3), f"mismatch vs reference, max err {max_err}"

    # TODO(synk): training-mode BatchNorm (batch statistics) is not implemented; BN is
    # applied in inference mode (running stats) folded into per-channel scale/bias.
    print("KERNEL_OK")
</pallas_src>

<mosaic_0001>
module attributes {stable_mosaic.version = 11 : i64} {
  func.func @_pool_conv0_kernel(%arg0: i32, %arg1: memref<1x289x128xbf16, #tpu.memory_space<vmem>>, %arg2: memref<25x289xbf16, #tpu.memory_space<vmem>>, %arg3: memref<128x128xbf16, #tpu.memory_space<vmem>>, %arg4: memref<1x128xf32, #tpu.memory_space<vmem>>, %arg5: memref<1x128xf32, #tpu.memory_space<vmem>>, %arg6: memref<1x25x128xbf16, #tpu.memory_space<vmem>>) attributes {dimension_semantics = [#tpu.dimension_semantics<parallel>], iteration_bounds = array<i64: 2>, scalar_prefetch = 0 : i64, scratch_operands = 0 : i64, tpu.core_type = #tpu.core_type<tc>, window_params = [{transform_indices = @transform_0, window_bounds = array<i64: 1, 289, 128>}, {pipeline_mode = #tpu.pipeline_mode<synchronous>, transform_indices = @transform_1, window_bounds = array<i64: 25, 289>}, {pipeline_mode = #tpu.pipeline_mode<synchronous>, transform_indices = @transform_2, window_bounds = array<i64: 128, 128>}, {pipeline_mode = #tpu.pipeline_mode<synchronous>, transform_indices = @transform_3, window_bounds = array<i64: 1, 128>}, {pipeline_mode = #tpu.pipeline_mode<synchronous>, transform_indices = @transform_4, window_bounds = array<i64: 1, 128>}, {transform_indices = @transform_5, window_bounds = array<i64: 1, 25, 128>}]} {
    %c0 = arith.constant 0 : index
    %c0_0 = arith.constant 0 : index
    %c0_1 = arith.constant 0 : index
    %0 = vector.load %arg1[%c0, %c0_0, %c0_1] : memref<1x289x128xbf16, #tpu.memory_space<vmem>>, vector<1x289x128xbf16>
    %1 = vector.shape_cast %0 : vector<1x289x128xbf16> to vector<289x128xbf16>
    %c0_2 = arith.constant 0 : index
    %c0_3 = arith.constant 0 : index
    %2 = vector.load %arg2[%c0_2, %c0_3] : memref<25x289xbf16, #tpu.memory_space<vmem>>, vector<25x289xbf16>
    %cst = arith.constant dense<0.000000e+00> : vector<25x128xf32>
    %3 = tpu.matmul %2, %1, %cst {dimension_numbers = #tpu.dot_dimension_numbers<[1], [0], [0], [1], [0, 0, 1, 1], [], []>} : vector<25x289xbf16>, vector<289x128xbf16>, vector<25x128xf32> -> vector<25x128xf32>
    %cst_4 = arith.constant 4.000000e-02 : f32
    %4 = vector.broadcast %cst_4 : f32 to vector<25x128xf32>
    %5 = arith.mulf %3, %4 : vector<25x128xf32>
    %6 = arith.truncf %5 : vector<25x128xf32> to vector<25x128xbf16>
    %c0_5 = arith.constant 0 : index
    %c0_6 = arith.constant 0 : index
    %7 = vector.load %arg3[%c0_5, %c0_6] : memref<128x128xbf16, #tpu.memory_space<vmem>>, vector<128x128xbf16>
    %cst_7 = arith.constant dense<0.000000e+00> : vector<25x128xf32>
    %8 = tpu.matmul %6, %7, %cst_7 {dimension_numbers = #tpu.dot_dimension_numbers<[1], [0], [0], [1], [0, 0, 1, 1], [], []>} : vector<25x128xbf16>, vector<128x128xbf16>, vector<25x128xf32> -> vector<25x128xf32>
    %c0_8 = arith.constant 0 : index
    %c0_9 = arith.constant 0 : index
    %9 = vector.load %arg4[%c0_8, %c0_9] : memref<1x128xf32, #tpu.memory_space<vmem>>, vector<1x128xf32>
    %10 = vector.broadcast %9 : vector<1x128xf32> to vector<25x128xf32>
    %11 = arith.mulf %8, %10 : vector<25x128xf32>
    %c0_10 = arith.constant 0 : index
    %c0_11 = arith.constant 0 : index
    %12 = vector.load %arg5[%c0_10, %c0_11] : memref<1x128xf32, #tpu.memory_space<vmem>>, vector<1x128xf32>
    %13 = vector.broadcast %12 : vector<1x128xf32> to vector<25x128xf32>
    %14 = arith.addf %11, %13 : vector<25x128xf32>
    %cst_12 = arith.constant 0.000000e+00 : f32
    %15 = vector.broadcast %cst_12 : f32 to vector<25x128xf32>
    %16 = arith.maximumf %14, %15 : vector<25x128xf32>
    %17 = arith.truncf %16 : vector<25x128xf32> to vector<25x128xbf16>
    %c0_13 = arith.constant 0 : index
    %c0_14 = arith.constant 0 : index
    %c0_15 = arith.constant 0 : index
    %18 = vector.load %arg6[%c0_13, %c0_14, %c0_15] : memref<1x25x128xbf16, #tpu.memory_space<vmem>>, vector<1x25x128xbf16>
    %19 = vector.shape_cast %18 : vector<1x25x128xbf16> to vector<25x128xbf16>
    %20 = vector.shape_cast %17 : vector<25x128xbf16> to vector<1x25x128xbf16>
    tpu.vector_store %arg6[%c0_13, %c0_14, %c0_15], %20 {strides = array<i32>} : memref<1x25x128xbf16, #tpu.memory_space<vmem>>, vector<1x25x128xbf16>,
    return
  }
  func.func @transform_0(%arg0: i32) -> (i32, i32, i32) {
    %c0_i32 = arith.constant 0 : i32
    %c0_i32_0 = arith.constant 0 : i32
    %c0_i32_1 = arith.constant 0 : i32
    return %arg0, %c0_i32, %c0_i32_0 : i32, i32, i32
  }
  func.func @transform_1(%arg0: i32) -> (i32, i32) {
    %c0_i32 = arith.constant 0 : i32
    %c0_i32_0 = arith.constant 0 : i32
    %c0_i32_1 = arith.constant 0 : i32
    return %c0_i32, %c0_i32_0 : i32, i32
  }
  func.func @transform_2(%arg0: i32) -> (i32, i32) {
    %c0_i32 = arith.constant 0 : i32
    %c0_i32_0 = arith.constant 0 : i32
    %c0_i32_1 = arith.constant 0 : i32
    return %c0_i32, %c0_i32_0 : i32, i32
  }
  func.func @transform_3(%arg0: i32) -> (i32, i32) {
    %c0_i32 = arith.constant 0 : i32
    %c0_i32_0 = arith.constant 0 : i32
    %c0_i32_1 = arith.constant 0 : i32
    return %c0_i32, %c0_i32_0 : i32, i32
  }
  func.func @transform_4(%arg0: i32) -> (i32, i32) {
    %c0_i32 = arith.constant 0 : i32
    %c0_i32_0 = arith.constant 0 : i32
    %c0_i32_1 = arith.constant 0 : i32
    return %c0_i32, %c0_i32_0 : i32, i32
  }
  func.func @transform_5(%arg0: i32) -> (i32, i32, i32) {
    %c0_i32 = arith.constant 0 : i32
    %c0_i32_0 = arith.constant 0 : i32
    %c0_i32_1 = arith.constant 0 : i32
    return %arg0, %c0_i32, %c0_i32_0 : i32, i32, i32
  }
}

</mosaic_0001>

<llo_original>
// kernel: tpu_custom_call.1
$region0: #{tpu_custom_call.1}
  #allocation0 [shape = 'u32[]', space=smem, size = 0x4, offset = 0x4, fixed_abs, tag = 'smem constant byte address 0x4 - core index']
  #allocation1 [shape = 'u32[144,128]{1,0:T(1,128)}', space=vmem, size = 0x12000, scoped, tag = 'internal scratch']
  %s0 = inlined_call_operand.vmem [shape: bf16[2,289,128], index: 0, kind: input, shape index: {}]
  %s1 = inlined_call_operand.vmem [shape: bf16[25,289], index: 1, kind: input, shape index: {}]
  %s2 = inlined_call_operand.vmem [shape: bf16[128,128], index: 2, kind: input, shape index: {}]
  %s3 = inlined_call_operand.vmem [shape: f32[1,128], index: 3, kind: input, shape index: {}]
  %s4 = inlined_call_operand.vmem [shape: f32[1,128], index: 4, kind: input, shape index: {}]
  %s5 = inlined_call_operand.vmem [shape: bf16[2,25,128], index: 5, kind: output, shape index: {}]
  %s6 = sld [smem:[#allocation0]]
  $region53: #{tpu_custom_call.1} parent=0
    _
  %s8 = ssub.s32 1, %s6
  %s9 = scalar_select 0, %s8, %s6
  loop: start=0, step=1, limit=4
  $region2: #{tpu_custom_call.1} parent=0 // loop_pre_header
    _
  $region3: #{tpu_custom_call.1} parent=0 // loop_header
    %s11 = sphi 0, %s15
    %p12 = scmp.ge.s32.totalorder %s11, 4
    %s21 = sphi 0, %s23
    %s24 = sphi 0, %s21
    %s25 = sphi 0, %s24
    %s41 = sphi 0, %s25
    %s45 = sphi 0, %s45
    %s47 = sphi 0, %s45
    %s48 = sphi 0, %s47
    %s62 = sphi 0, %s48
    %s66 = sphi 0, %s66
    %s68 = sphi 0, %s66
    %s69 = sphi 0, %s68
    %s83 = sphi 0, %s69
    %s87 = sphi 0, %s87
    %s89 = sphi 0, %s87
    %s90 = sphi 0, %s89
    %s104 = sphi 0, %s90
    %s108 = sphi 0, %s108
    %s110 = sphi 0, %s108
    %s111 = sphi 0, %s110
    %s125 = sphi 0, %s111
    %s131 = sphi 0, %s133
    %s134 = sphi 0, %s131
    %s135 = sphi 0, %s134
    %s151 = sphi 0, %s135
  $region4: #{tpu_custom_call.1} parent=0 // loop_header_branch
    %14 = sbr.rel (%p12) target = $region8
  $region5: #{tpu_custom_call.1} parent=0 // loop_body
    %s16 = ssub.s32 %s11, 1
    %s17 = ssub.s32 %s11, 2
    %s18 = sadd.s32 %s11, 1
    %s19 = ssub.s32 %s11, %s18
    %p20 = scmp.eq.s32.totalorder %s19, 0
    %s22 = sadd.s32 %s21, 1
    %s23 = scalar_select %p20, %s21, %s22
    %p26 = pneg %p20
    %p27 = scmp.eq.s32.totalorder %s11, 1
    %p28 = por %p26, %p27
    %p29 = scmp.ne.s32.totalorder %s21, %s24
    %p30 = scmp.eq.s32.totalorder %s11, 0
    %p31 = por %p29, %p30
    %p32 = scmp.ne.s32.totalorder %s21, %s24
    %p33 = scmp.eq.s32.totalorder %s16, 1
    %p34 = por %p32, %p33
    %p35 = scmp.ne.s32.totalorder %s24, %s25
    %p36 = scmp.eq.s32.totalorder %s16, 0
    %p37 = por %p35, %p36
    %p38 = scmp.ne.s32.totalorder %s24, %s25
    %p39 = scmp.eq.s32.totalorder %s17, 1
    %p40 = por %p38, %p39
    %p42 = scmp.ne.s32.totalorder %s25, %s41
    %p43 = scmp.eq.s32.totalorder %s17, 0
    %p44 = por %p42, %p43
    %s46 = sadd.s32 %s45, 1
    %p49 = scmp.eq.s32.totalorder %s11, 1
    %p50 = scmp.ne.s32.totalorder %s45, %s47
    %p51 = scmp.eq.s32.totalorder %s11, 0
    %p52 = por %p50, %p51
    %p53 = scmp.ne.s32.totalorder %s45, %s47
    %p54 = scmp.eq.s32.totalorder %s16, 1
    %p55 = por %p53, %p54
    %p56 = scmp.ne.s32.totalorder %s47, %s48
    %p57 = scmp.eq.s32.totalorder %s16, 0
    %p58 = por %p56, %p57
    %p59 = scmp.ne.s32.totalorder %s47, %s48
    %p60 = scmp.eq.s32.totalorder %s17, 1
    %p61 = por %p59, %p60
    %p63 = scmp.ne.s32.totalorder %s48, %s62
    %p64 = scmp.eq.s32.totalorder %s17, 0
    %p65 = por %p63, %p64
    %s67 = sadd.s32 %s66, 1
    %p70 = scmp.eq.s32.totalorder %s11, 1
    %p71 = scmp.ne.s32.totalorder %s66, %s68
    %p72 = scmp.eq.s32.totalorder %s11, 0
    %p73 = por %p71, %p72
    %p74 = scmp.ne.s32.totalorder %s66, %s68
    %p75 = scmp.eq.s32.totalorder %s16, 1
    %p76 = por %p74, %p75
    %p77 = scmp.ne.s32.totalorder %s68, %s69
    %p78 = scmp.eq.s32.totalorder %s16, 0
    %p79 = por %p77, %p78
    %p80 = scmp.ne.s32.totalorder %s68, %s69
    %p81 = scmp.eq.s32.totalorder %s17, 1
    %p82 = por %p80, %p81
    %p84 = scmp.ne.s32.totalorder %s69, %s83
    %p85 = scmp.eq.s32.totalorder %s17, 0
    %p86 = por %p84, %p85
    %s88 = sadd.s32 %s87, 1
    %p91 = scmp.eq.s32.totalorder %s11, 1
    %p92 = scmp.ne.s32.totalorder %s87, %s89
    %p93 = scmp.eq.s32.totalorder %s11, 0
    %p94 = por %p92, %p93
    %p95 = scmp.ne.s32.totalorder %s87, %s89
    %p96 = scmp.eq.s32.totalorder %s16, 1
    %p97 = por %p95, %p96
    %p98 = scmp.ne.s32.totalorder %s89, %s90
    %p99 = scmp.eq.s32.totalorder %s16, 0
    %p100 = por %p98, %p99
    %p101 = scmp.ne.s32.totalorder %s89, %s90
    %p102 = scmp.eq.s32.totalorder %s17, 1
    %p103 = por %p101, %p102
    %p105 = scmp.ne.s32.totalorder %s90, %s104
    %p106 = scmp.eq.s32.totalorder %s17, 0
    %p107 = por %p105, %p106
    %s109 = sadd.s32 %s108, 1
    %p112 = scmp.eq.s32.totalorder %s11, 1
    %p113 = scmp.ne.s32.totalorder %s108, %s110
    %p114 = scmp.eq.s32.totalorder %s11, 0
    %p115 = por %p113, %p114
    %p116 = scmp.ne.s32.totalorder %s108, %s110
    %p117 = scmp.eq.s32.totalorder %s16, 1
    %p118 = por %p116, %p117
    %p119 = scmp.ne.s32.totalorder %s110, %s111
    %p120 = scmp.eq.s32.totalorder %s16, 0
    %p121 = por %p119, %p120
    %p122 = scmp.ne.s32.totalorder %s110, %s111
    %p123 = scmp.eq.s32.totalorder %s17, 1
    %p124 = por %p122, %p123
    %p126 = scmp.ne.s32.totalorder %s111, %s125
    %p127 = scmp.eq.s32.totalorder %s17, 0
    %p128 = por %p126, %p127
    %s129 = ssub.s32 %s11, %s18
    %p130 = scmp.eq.s32.totalorder %s129, 0
    %s132 = sadd.s32 %s131, 1
    %s133 = scalar_select %p130, %s131, %s132
    %p136 = pneg %p130
    %p137 = scmp.eq.s32.totalorder %s11, 1
    %p138 = por %p136, %p137
    %p139 = scmp.ne.s32.totalorder %s131, %s134
    %p140 = scmp.eq.s32.totalorder %s11, 0
    %p141 = por %p139, %p140
    %p142 = scmp.ne.s32.totalorder %s131, %s134
    %p143 = scmp.eq.s32.totalorder %s16, 1
    %p144 = por %p142, %p143
    %p145 = scmp.ne.s32.totalorder %s134, %s135
    %p146 = scmp.eq.s32.totalorder %s16, 0
    %p147 = por %p145, %p146
    %p148 = scmp.ne.s32.totalorder %s134, %s135
    %p149 = scmp.eq.s32.totalorder %s17, 1
    %p150 = por %p148, %p149
    %p152 = scmp.ne.s32.totalorder %s135, %s151
    %p153 = scmp.eq.s32.totalorder %s17, 0
    %p154 = por %p152, %p153
    %p155 = scmp.le.s32.totalorder 1, %s11
    %p156 = scmp.lt.s32.totalorder %s11, 3
    %p157 = pnand %p155, %p156
    %p158 = pneg %p157
    // Predicated region
    $region9: #{tpu_custom_call.1} parent=5 // pred_check
      _
    $region10: #{tpu_custom_call.1} parent=5 // pred_check_branch
      %160 = sbr.rel (%p157) target = $region12
    $region11: #{tpu_custom_call.1} parent=5 // pred_region
      %s161 = ssub.s32 %s11, 1
      // Predicated region
      $region13: #{tpu_custom_call.1} parent=11 // pred_check
        %p162 = pneg %p58
      $region14: #{tpu_custom_call.1} parent=11 // pred_check_branch
        %164 = sbr.rel (%p162) target = $region16
      $region15: #{tpu_custom_call.1} parent=11 // pred_region
        _
      $region16: #{tpu_custom_call.1} parent=11 // pred_fallthru
        _
      // Predicated region
      $region17: #{tpu_custom_call.1} parent=11 // pred_check
        %p165 = pneg %p79
      $region18: #{tpu_custom_call.1} parent=11 // pred_check_branch
        %167 = sbr.rel (%p165) target = $region20
      $region19: #{tpu_custom_call.1} parent=11 // pred_region
        _
      $region20: #{tpu_custom_call.1} parent=11 // pred_fallthru
        _
      // Predicated region
      $region21: #{tpu_custom_call.1} parent=11 // pred_check
        %p168 = pneg %p100
      $region22: #{tpu_custom_call.1} parent=11 // pred_check_branch
        %170 = sbr.rel (%p168) target = $region24
      $region23: #{tpu_custom_call.1} parent=11 // pred_region
        _
      $region24: #{tpu_custom_call.1} parent=11 // pred_fallthru
        _
      // Predicated region
      $region25: #{tpu_custom_call.1} parent=11 // pred_check
        %p171 = pneg %p121
      $region26: #{tpu_custom_call.1} parent=11 // pred_check_branch
        %173 = sbr.rel (%p171) target = $region28
      $region27: #{tpu_custom_call.1} parent=11 // pred_region
        _
      $region28: #{tpu_custom_call.1} parent=11 // pred_fallthru
        _
    $region12: #{tpu_custom_call.1} parent=5 // pred_fallthru
      _
    %p174 = scmp.lt.s32.totalorder %s11, 2
    // Predicated region
    $region29: #{tpu_custom_call.1} parent=5 // pred_check
      %p175 = pneg %p174
    $region30: #{tpu_custom_call.1} parent=5 // pred_check_branch
      %177 = sbr.rel (%p175) target = $region32
    $region31: #{tpu_custom_call.1} parent=5 // pred_region
      // Predicated region
      $region33: #{tpu_custom_call.1} parent=31 // pred_check
        %p178 = pneg %p31
      $region34: #{tpu_custom_call.1} parent=31 // pred_check_branch
        %180 = sbr.rel (%p178) target = $region36
      $region35: #{tpu_custom_call.1} parent=31 // pred_region
        %p181 = scmp.lt.s32.totalorder %s11, 1
        %s182 = scalar_select %p181, %s11, 1
        %s183 = smul.addr %s182, 37
        %s184 = smul.addr %s183, 4
        %s185 = scalar_lea.vmem %s0, %s184
      $region36: #{tpu_custom_call.1} parent=31 // pred_fallthru
        _
    $region32: #{tpu_custom_call.1} parent=5 // pred_fallthru
      _
    %p186 = scmp.le.s32.totalorder 1, %s11
    %p187 = scmp.lt.s32.totalorder %s11, 3
    %p188 = pnand %p186, %p187
    %p189 = pneg %p188
    // Predicated region
    $region37: #{tpu_custom_call.1} parent=5 // pred_check
      _
    $region38: #{tpu_custom_call.1} parent=5 // pred_check_branch
      %191 = sbr.rel (%p188) target = $region40
    $region39: #{tpu_custom_call.1} parent=5 // pred_region
      %s192 = ssub.s32 %s11, 1
      %p193 = scmp.lt.s32.totalorder %s16, 1
      %s194 = scalar_select %p193, %s16, 1
      %s195 = smul.addr %s194, 37
      %s196 = smul.addr %s195, 4
      %s197 = scalar_lea.vmem %s0, %s196
      %p198 = pneg %p37
      %p199 = pneg %p34
      %p200 = pneg %p58
      %p201 = pneg %p55
      %p202 = pneg %p79
      %p203 = pneg %p76
      %p204 = pneg %p100
      %p205 = pneg %p97
      %p206 = pneg %p121
      %p207 = pneg %p118
      %p208 = pneg %p147
      %p209 = pneg %p144
      %p210 = scmp.lt.s32.totalorder %s16, 1
      %s211 = scalar_select %p210, %s16, 1
      %s212 = smul.addr %s211, 4
      %s213 = smul.addr %s212, 4
      %s214 = scalar_lea.vmem %s5, %s213
      %p215 = scmp.lt.s32.totalorder %s16, 1
      %s216 = scalar_select %p215, %s16, 1
      %s217 = smul.addr %s216, 37
      %s218 = smul.addr %s217, 4
      %s219 = scalar_lea.vmem %s0, %s218
      %p220 = scmp.lt.s32.totalorder %s16, 1
      %s221 = scalar_select %p220, %s16, 1
      %s222 = smul.addr %s221, 4
      %s223 = smul.addr %s222, 4
      %s224 = scalar_lea.vmem %s5, %s223
      %v226 = vld [vmem:[%s219] sm:$0xf]
      %v227 = vld [vmem:[%s219 + $0x4] sm:$0xf]
      %v228 = vld [vmem:[%s219 + $0x8] sm:$0xf]
      %v229 = vld [vmem:[%s219 + $0xc] sm:$0xf]
      %v230 = vld [vmem:[%s219 + $0x10] sm:$0xf]
      %v231 = vld [vmem:[%s219 + $0x14] sm:$0xf]
      %v232 = vld [vmem:[%s219 + $0x18] sm:$0xf]
      %v233 = vld [vmem:[%s219 + $0x1c] sm:$0xf]
      %v234 = vld [vmem:[%s219 + $0x20] sm:$0xf]
      %v235 = vld [vmem:[%s219 + $0x24] sm:$0xf]
      %v236 = vld [vmem:[%s219 + $0x28] sm:$0xf]
      %v237 = vld [vmem:[%s219 + $0x2c] sm:$0xf]
      %v238 = vld [vmem:[%s219 + $0x30] sm:$0xf]
      %v239 = vld [vmem:[%s219 + $0x34] sm:$0xf]
      %v240 = vld [vmem:[%s219 + $0x38] sm:$0xf]
      %v241 = vld [vmem:[%s219 + $0x3c] sm:$0xf]
      %v242 = vld [vmem:[%s219 + $0x40] sm:$0xf]
      %v243 = vld [vmem:[%s219 + $0x44] sm:$0xf]
      %v244 = vld [vmem:[%s219 + $0x48] sm:$0xf]
      %v245 = vld [vmem:[%s219 + $0x4c] sm:$0xf]
      %v246 = vld [vmem:[%s219 + $0x50] sm:$0xf]
      %v247 = vld [vmem:[%s219 + $0x54] sm:$0xf]
      %v248 = vld [vmem:[%s219 + $0x58] sm:$0xf]
      %v249 = vld [vmem:[%s219 + $0x5c] sm:$0xf]
      %v250 = vld [vmem:[%s219 + $0x60] sm:$0xf]
      %v251 = vld [vmem:[%s219 + $0x64] sm:$0xf]
      %v252 = vld [vmem:[%s219 + $0x68] sm:$0xf]
      %v253 = vld [vmem:[%s219 + $0x6c] sm:$0xf]
      %v254 = vld [vmem:[%s219 + $0x70] sm:$0xf]
      %v255 = vld [vmem:[%s219 + $0x74] sm:$0xf]
      %v256 = vld [vmem:[%s219 + $0x78] sm:$0xf]
      %v257 = vld [vmem:[%s219 + $0x7c] sm:$0xf]
      %v258 = vld [vmem:[%s219 + $0x80] sm:$0xf]
      %v259 = vld [vmem:[%s219 + $0x84] sm:$0xf]
      %v260 = vld [vmem:[%s219 + $0x88] sm:$0xf]
      %v261 = vld [vmem:[%s219 + $0x8c] sm:$0xf]
      %v262 = vld [vmem:[%s219 + $0x90] sm:$0x1]
      %v263 = vld [vmem:[%s1] sm:$0xff]
      %v264 = vld [vmem:[%s1 + $0x8] sm:$0xf]
      %v265 = vld [vmem:[%s1 + $0xc] sm:$0xff]
      %v266 = vld [vmem:[%s1 + $0x14] sm:$0xf]
      %v267 = vld [vmem:[%s1 + $0x18] sm:$0xff]
      %v268 = vld [vmem:[%s1 + $0x20] sm:$0xf]
      %v269 = vld [vmem:[%s1 + $0x24] sm:$0x11]
      %v270 = vld [vmem:[%s1 + $0x2c] sm:$0x1]
      %v279 = vunpack.c.l.b16 %v263
      %v280 = vunpack.c.h.b16 %v263
      %v281 = vunpack.c.l.b16 %v264
      %v282 = vunpack.c.l.b16 %v265
      %v283 = vunpack.c.h.b16 %v265
      %v284 = vunpack.c.l.b16 %v266
      %v285 = vunpack.c.l.b16 %v267
      %v286 = vunpack.c.h.b16 %v267
      %v287 = vunpack.c.l.b16 %v268
      %v288 = vunpack.c.l.b16 %v269
      %v289 = vunpack.c.h.b16 %v269
      %v290 = vunpack.c.l.b16 %v270
      %v291 = vpack.c.b16 %v282, %v279
      %v292 = vpack.c.b16 %v283, %v280
      %v293 = vpack.c.b16 %v284, %v281
      %v294 = vpack.c.b16 %v288, %v285
      %v295 = vpack.c.b16 %v289, %v286
      %v296 = vpack.c.b16 %v290, %v287
      %v338 = vunpack.c.l.b16 %v226
      %v339 = vunpack.c.l.b16 %v227
      %v340 = vunpack.c.l.b16 %v228
      %v341 = vunpack.c.l.b16 %v229
      %v342 = vunpack.c.l.b16 %v230
      %v343 = vunpack.c.l.b16 %v231
      %v344 = vunpack.c.l.b16 %v232
      %v345 = vunpack.c.l.b16 %v233
      %v346 = vunpack.c.l.b16 %v234
      %v347 = vunpack.c.l.b16 %v235
      %v348 = vunpack.c.l.b16 %v236
      %v349 = vunpack.c.l.b16 %v237
      %v350 = vunpack.c.l.b16 %v238
      %v351 = vunpack.c.l.b16 %v239
      %v352 = vunpack.c.l.b16 %v240
      %v353 = vunpack.c.l.b16 %v241
      %v354 = vunpack.c.l.b16 %v242
      %v355 = vunpack.c.l.b16 %v243
      %v356 = vunpack.c.l.b16 %v244
      %v357 = vunpack.c.l.b16 %v245
      %v358 = vunpack.c.l.b16 %v246
      %v359 = vunpack.c.l.b16 %v247
      %v360 = vunpack.c.l.b16 %v248
      %v361 = vunpack.c.l.b16 %v249
      %v362 = vunpack.c.l.b16 %v250
      %v363 = vunpack.c.l.b16 %v251
      %v364 = vunpack.c.l.b16 %v252
      %v365 = vunpack.c.l.b16 %v253
      %v366 = vunpack.c.l.b16 %v254
      %v367 = vunpack.c.l.b16 %v255
      %v368 = vunpack.c.l.b16 %v256
      %v369 = vunpack.c.l.b16 %v257
      %v370 = vunpack.c.l.b16 %v258
      %v371 = vunpack.c.l.b16 %v259
      %v372 = vunpack.c.l.b16 %v260
      %v373 = vunpack.c.l.b16 %v261
      %v374 = vunpack.c.l.b16 %v262
      %v375 = vpack.c.b16 %v339, %v338
      %v376 = vpack.c.b16 %v341, %v340
      %v377 = vpack.c.b16 %v343, %v342
      %v378 = vpack.c.b16 %v345, %v344
      %v379 = vpack.c.b16 %v347, %v346
      %v380 = vpack.c.b16 %v349, %v348
      %v381 = vpack.c.b16 %v351, %v350
      %v382 = vpack.c.b16 %v353, %v352
      %v383 = vpack.c.b16 %v355, %v354
      %v384 = vpack.c.b16 %v357, %v356
      %v385 = vpack.c.b16 %v359, %v358
      %v386 = vpack.c.b16 %v361, %v360
      %v387 = vpack.c.b16 %v363, %v362
      %v388 = vpack.c.b16 %v365, %v364
      %v389 = vpack.c.b16 %v367, %v366
      %v390 = vpack.c.b16 %v369, %v368
      %v391 = vpack.c.b16 %v371, %v370
      %v392 = vpack.c.b16 %v373, %v372
      %v393 = vpack.c.b16 %v374, %v374
      %vm412 = vcmask 269312
      %v414 = vsel %vm412, %v293, 0
      %v417 = vsel %vm412, %v296, 0
      %vm419 = vcmask 1040384
      %v420 = vsel 0, 4294967295, 65535
      %v421 = vsel %vm419, %v420, 0
      %v423 = vand.u32 %v393, %v421
      %425 = vmatprep.subr.bf16.mxu0 0
      %426 = vmatpush1.bf16.msra.mxu0 %v375
      %427 = vmatprep.subr.bf16.mxu0 0
      %428 = vmatpush1.bf16.msra.mxu0 %v376
      %429 = vmatprep.subr.bf16.mxu0 0
      %430 = vmatpush1.bf16.msra.mxu0 %v377
      %431 = vmatprep.subr.bf16.mxu0 0
      %432 = vmatpush1.bf16.msra.mxu0 %v378
      %433 = vmatprep.subr.bf16.mxu0 0
      %434 = vmatpush1.bf16.msra.mxu0 %v379
      %435 = vmatprep.subr.bf16.mxu0 0
      %436 = vmatpush1.bf16.msra.mxu0 %v380
      %437 = vmatprep.subr.bf16.mxu0 0
      %438 = vmatpush1.bf16.msra.mxu0 %v381
      %439 = vmatprep.subr.bf16.mxu0 0
      %440 = vmatpush1.bf16.msra.mxu0 %v382
      %441 = vmatprep.subr.bf16.mxu0 0
      %442 = vmatpush1.bf16.msra.mxu0 %v383
      %443 = vmatprep.subr.bf16.mxu0 0
      %444 = vmatpush1.bf16.msra.mxu0 %v384
      %445 = vmatprep.subr.bf16.mxu0 0
      %446 = vmatpush1.bf16.msra.mxu0 %v385
      %447 = vmatprep.subr.bf16.mxu0 0
      %448 = vmatpush1.bf16.msra.mxu0 %v386
      %449 = vmatprep.subr.bf16.mxu0 0
      %450 = vmatpush1.bf16.msra.mxu0 %v387
      %451 = vmatprep.subr.bf16.mxu0 0
      %452 = vmatpush1.bf16.msra.mxu0 %v388
      %453 = vmatprep.subr.bf16.mxu0 0
      %454 = vmatpush1.bf16.msra.mxu0 %v389
      %455 = vmatprep.subr.bf16.mxu0 0
      %456 = vmatpush1.bf16.msra.mxu0 %v390
      %457 = vmatprep.mubr.bf16.mxu0 %v292
      %458 = vmatmul.mubr.bf16.gmra.mrb[0].mxu0 %v291
      %v459 = vpop.f32.mrb[0].mxu0
      %v460 = vadd.f32 0.0, %v459
      %v461 = vpop.f32.mrb[0].mxu0
      %v462 = vpop.f32.mrb[0].mxu0
      %v463 = vadd.f32 0.0, %v462
      %v464 = vpop.f32.mrb[0].mxu0
      %465 = vmatprep.mubr.bf16.mxu0 %v295
      %466 = vmatmul.mubr.bf16.gmra.mrb[0].mxu0 %v294
      %v467 = vpop.f32.mrb[0].mxu0
      %v468 = vadd.f32 0.0, %v467
      %v469 = vpop.f32.mrb[0].mxu0
      %v470 = vpop.f32.mrb[0].mxu0
      %v471 = vadd.f32 0.0, %v470
      %v472 = vpop.f32.mrb[0].mxu0
      %473 = vdwg.mxu0
      %474 = vmatprep.subr.bf16.mxu0 0
      %475 = vmatpush1.bf16.msra.mxu0 %v391
      %476 = vmatprep.subr.bf16.mxu0 0
      %477 = vmatpush1.bf16.msra.mxu0 %v392
      %478 = vmatprep.subr.bf16.mxu0 0
      %479 = vmatpush1.bf16.msra.mxu0 %v423
      %480 = vmatprep.subr.bf16.mxu0 0
      %481 = vmatpush1.bf16.msra.mxu0 0
      %482 = vmatprep.subr.bf16.mxu0 0
      %483 = vmatpush1.bf16.msra.mxu0 0
      %484 = vmatprep.subr.bf16.mxu0 0
      %485 = vmatpush1.bf16.msra.mxu0 0
      %486 = vmatprep.subr.bf16.mxu0 0
      %487 = vmatpush1.bf16.msra.mxu0 0
      %488 = vmatprep.subr.bf16.mxu0 0
      %489 = vmatpush1.bf16.msra.mxu0 0
      %490 = vmatprep.subr.bf16.mxu0 0
      %491 = vmatpush1.bf16.msra.mxu0 0
      %492 = vmatprep.subr.bf16.mxu0 0
      %493 = vmatpush1.bf16.msra.mxu0 0
      %494 = vmatprep.subr.bf16.mxu0 0
      %495 = vmatpush1.bf16.msra.mxu0 0
      %496 = vmatprep.subr.bf16.mxu0 0
      %497 = vmatpush1.bf16.msra.mxu0 0
      %498 = vmatprep.subr.bf16.mxu0 0
      %499 = vmatpush1.bf16.msra.mxu0 0
      %500 = vmatprep.subr.bf16.mxu0 0
      %501 = vmatpush1.bf16.msra.mxu0 0
      %502 = vmatprep.subr.bf16.mxu0 0
      %503 = vmatpush1.bf16.msra.mxu0 0
      %504 = vmatprep.subr.bf16.mxu0 0
      %505 = vmatpush1.bf16.msra.mxu0 0
      %506 = vmatprep.mubr.bf16.mxu0 0
      %507 = vmatmul.mubr.bf16.gmra.mrb[0].mxu0 %v414
      %v508 = vpop.f32.mrb[0].mxu0
      %v509 = vadd.f32 %v460, %v508
      %v510 = vpop.f32.mrb[0].mxu0
      %v511 = vpop.f32.mrb[0].mxu0
      %v512 = vadd.f32 %v463, %v511
      %v513 = vpop.f32.mrb[0].mxu0
      %514 = vmatprep.mubr.bf16.mxu0 0
      %515 = vmatmul.mubr.bf16.gmra.mrb[0].mxu0 %v417
      %v516 = vpop.f32.mrb[0].mxu0
      %v517 = vadd.f32 %v468, %v516
      %v518 = vpop.f32.mrb[0].mxu0
      %v519 = vpop.f32.mrb[0].mxu0
      %v520 = vadd.f32 %v471, %v519
      %v521 = vpop.f32.mrb[0].mxu0
      %522 = vdwg.mxu0
      %v523 = vmul.f32 %v509, 0.04
      %v524 = vmul.f32 %v512, 0.04
      %v525 = vmul.f32 %v517, 0.04
      %v526 = vmul.f32 %v520, 0.04
      %v527 = vpack.c.bf16 %v524, %v523
      %v528 = vpack.c.bf16 %v526, %v525
      %v529 = vld [vmem:[%s2] sm:$0xf]
      %v530 = vld [vmem:[%s2 + $0x4] sm:$0xf]
      %v531 = vld [vmem:[%s2 + $0x8] sm:$0xf]
      %v532 = vld [vmem:[%s2 + $0xc] sm:$0xf]
      %v533 = vld [vmem:[%s2 + $0x10] sm:$0xf]
      %v534 = vld [vmem:[%s2 + $0x14] sm:$0xf]
      %v535 = vld [vmem:[%s2 + $0x18] sm:$0xf]
      %v536 = vld [vmem:[%s2 + $0x1c] sm:$0xf]
      %v537 = vld [vmem:[%s2 + $0x20] sm:$0xf]
      %v538 = vld [vmem:[%s2 + $0x24] sm:$0xf]
      %v539 = vld [vmem:[%s2 + $0x28] sm:$0xf]
      %v540 = vld [vmem:[%s2 + $0x2c] sm:$0xf]
      %v541 = vld [vmem:[%s2 + $0x30] sm:$0xf]
      %v542 = vld [vmem:[%s2 + $0x34] sm:$0xf]
      %v543 = vld [vmem:[%s2 + $0x38] sm:$0xf]
      %v544 = vld [vmem:[%s2 + $0x3c] sm:$0xf]
      %v561 = vunpack.c.l.b16 %v529
      %v562 = vunpack.c.l.b16 %v530
      %v563 = vunpack.c.l.b16 %v531
      %v564 = vunpack.c.l.b16 %v532
      %v565 = vunpack.c.l.b16 %v533
      %v566 = vunpack.c.l.b16 %v534
      %v567 = vunpack.c.l.b16 %v535
      %v568 = vunpack.c.l.b16 %v536
      %v569 = vunpack.c.l.b16 %v537
      %v570 = vunpack.c.l.b16 %v538
      %v571 = vunpack.c.l.b16 %v539
      %v572 = vunpack.c.l.b16 %v540
      %v573 = vunpack.c.l.b16 %v541
      %v574 = vunpack.c.l.b16 %v542
      %v575 = vunpack.c.l.b16 %v543
      %v576 = vunpack.c.l.b16 %v544
      %v577 = vpack.c.b16 %v562, %v561
      %v578 = vpack.c.b16 %v564, %v563
      %v579 = vpack.c.b16 %v566, %v565
      %v580 = vpack.c.b16 %v568, %v567
      %v581 = vpack.c.b16 %v570, %v569
      %v582 = vpack.c.b16 %v572, %v571
      %v583 = vpack.c.b16 %v574, %v573
      %v584 = vpack.c.b16 %v576, %v575
      %593 = vmatprep.subr.bf16.mxu0 0
      %594 = vmatpush1.bf16.msra.mxu0 %v577
      %595 = vmatprep.subr.bf16.mxu0 0
      %596 = vmatpush1.bf16.msra.mxu0 %v578
      %597 = vmatprep.subr.bf16.mxu0 0
      %598 = vmatpush1.bf16.msra.mxu0 %v579
      %599 = vmatprep.subr.bf16.mxu0 0
      %600 = vmatpush1.bf16.msra.mxu0 %v580
      %601 = vmatprep.subr.bf16.mxu0 0
      %602 = vmatpush1.bf16.msra.mxu0 %v581
      %603 = vmatprep.subr.bf16.mxu0 0
      %604 = vmatpush1.bf16.msra.mxu0 %v582
      %605 = vmatprep.subr.bf16.mxu0 0
      %606 = vmatpush1.bf16.msra.mxu0 %v583
      %607 = vmatprep.subr.bf16.mxu0 0
      %608 = vmatpush1.bf16.msra.mxu0 %v584
      %609 = vmatprep.subr.bf16.mxu0 0
      %610 = vmatpush1.bf16.msra.mxu0 0
      %611 = vmatprep.subr.bf16.mxu0 0
      %612 = vmatpush1.bf16.msra.mxu0 0
      %613 = vmatprep.subr.bf16.mxu0 0
      %614 = vmatpush1.bf16.msra.mxu0 0
      %615 = vmatprep.subr.bf16.mxu0 0
      %616 = vmatpush1.bf16.msra.mxu0 0
      %617 = vmatprep.subr.bf16.mxu0 0
      %618 = vmatpush1.bf16.msra.mxu0 0
      %619 = vmatprep.subr.bf16.mxu0 0
      %620 = vmatpush1.bf16.msra.mxu0 0
      %621 = vmatprep.subr.bf16.mxu0 0
      %622 = vmatpush1.bf16.msra.mxu0 0
      %623 = vmatprep.subr.bf16.mxu0 0
      %624 = vmatpush1.bf16.msra.mxu0 0
      %625 = vmatprep.mubr.bf16.mxu0 0
      %626 = vmatmul.mubr.bf16.gmra.mrb[0].mxu0 %v527
      %v627 = vpop.f32.mrb[0].mxu0
      %v628 = vadd.f32 0.0, %v627
      %v629 = vpop.f32.mrb[0].mxu0
      %v630 = vpop.f32.mrb[0].mxu0
      %v631 = vadd.f32 0.0, %v630
      %v632 = vpop.f32.mrb[0].mxu0
      %633 = vmatprep.mubr.bf16.mxu0 0
      %634 = vmatmul.mubr.bf16.gmra.mrb[0].mxu0 %v528
      %v635 = vpop.f32.mrb[0].mxu0
      %v636 = vadd.f32 0.0, %v635
      %v637 = vpop.f32.mrb[0].mxu0
      %v638 = vpop.f32.mrb[0].mxu0
      %v639 = vadd.f32 0.0, %v638
      %v640 = vpop.f32.mrb[0].mxu0
      %641 = vdwg.mxu0
      %v642 = vld [vmem:[%s3] sm:$0x1]
      %v644 = vlaneseq
      %v645 = vshrl.u32 %v644, 7
      %v646 = vsub.s32 0, %v645
      %v647 = vrot.slane %v642, %v646
      %v649 = vmul.f32 %v628, %v647
      %v650 = vmul.f32 %v631, %v647
      %v651 = vmul.f32 %v636, %v647
      %v652 = vmul.f32 %v639, %v647
      %v653 = vld [vmem:[%s4] sm:$0x1]
      %v655 = vlaneseq
      %v656 = vshrl.u32 %v655, 7
      %v657 = vsub.s32 0, %v656
      %v658 = vrot.slane %v653, %v657
      %v660 = vadd.f32 %v649, %v658
      %v661 = vadd.f32 %v650, %v658
      %v662 = vadd.f32 %v651, %v658
      %v663 = vadd.f32 %v652, %v658
      %v664 = vmax.f32 %v660, 0.0
      %v665 = vmax.f32 %v661, 0.0
      %v666 = vmax.f32 %v662, 0.0
      %v667 = vmax.f32 %v663, 0.0
      %v668 = vpack.c.bf16 %v665, %v664
      %v669 = vpack.c.bf16 %v667, %v666
      %v672 = vunpack.c.l.b16 %v668
      %v673 = vunpack.c.h.b16 %v668
      %v674 = vunpack.c.l.b16 %v669
      %v675 = vunpack.c.h.b16 %v669
      %v676 = vpack.c.b16 %v672, %v672
      %v677 = vpack.c.b16 %v673, %v673
      %v678 = vpack.c.b16 %v674, %v674
      %v679 = vpack.c.b16 %v675, %v675
      %684 = vst [vmem:[%s224] sm:$0xf] %v676
      %685 = vst [vmem:[%s224 + $0x4] sm:$0xf] %v677
      %686 = vst [vmem:[%s224 + $0x8] sm:$0xf] %v678
      %vm687 = vcmask 1040384
      %vm688 = vsmask.f32 256
      %vm689 = vmand %vm687, %vm688
      %v690 = vld [vmem:[%s224 + $0xc] sm:$0x1]
      %v691 = vsel %vm689, %v679, %v690
      %692 = vst [vmem:[%s224 + $0xc] sm:$0x1] %v691
      %p693 = scmp.lt.s32.totalorder %s16, 1
      %s694 = scalar_select %p693, %s16, 1
      %s695 = smul.addr %s694, 4
      %s696 = smul.addr %s695, 4
      %s697 = scalar_lea.vmem %s5, %s696
      // Predicated region
      $region41: #{tpu_custom_call.1} parent=39 // pred_check
        %p698 = pneg %p144
      $region42: #{tpu_custom_call.1} parent=39 // pred_check_branch
        %700 = sbr.rel (%p698) target = $region44
      $region43: #{tpu_custom_call.1} parent=39 // pred_region
        _
      $region44: #{tpu_custom_call.1} parent=39 // pred_fallthru
        _
    $region40: #{tpu_custom_call.1} parent=5 // pred_fallthru
      _
    %p701 = scmp.le.s32.totalorder 2, %s11
    // Predicated region
    $region45: #{tpu_custom_call.1} parent=5 // pred_check
      %p702 = pneg %p701
    $region46: #{tpu_custom_call.1} parent=5 // pred_check_branch
      %704 = sbr.rel (%p702) target = $region48
    $region47: #{tpu_custom_call.1} parent=5 // pred_region
      %s705 = ssub.s32 %s11, 2
      // Predicated region
      $region49: #{tpu_custom_call.1} parent=47 // pred_check
        %p706 = pneg %p150
      $region50: #{tpu_custom_call.1} parent=47 // pred_check_branch
        %708 = sbr.rel (%p706) target = $region52
      $region51: #{tpu_custom_call.1} parent=47 // pred_region
        %p709 = scmp.lt.s32.totalorder %s17, 1
        %s710 = scalar_select %p709, %s17, 1
        %s711 = smul.addr %s710, 4
        %s712 = smul.addr %s711, 4
        %s713 = scalar_lea.vmem %s5, %s712
      $region52: #{tpu_custom_call.1} parent=47 // pred_fallthru
        _
    $region48: #{tpu_custom_call.1} parent=5 // pred_fallthru
      _
  $region6: #{tpu_custom_call.1} parent=0 // loop_footer
    %s15 = sadd.s32 1, %s11
  $region7: #{tpu_custom_call.1} parent=0 // loop_footer_branch
    %10 = sbr.rel target = $region3
  $region8: #{tpu_custom_call.1} parent=0 // loop_exit
    _

</llo_original>
